<compile_context>
chip_gen: v7x
topology: tpu7x:2x2x1
jax: 0.10.0
libtpu: 0.0.40
codegen_flags: <defaults>
</compile_context>

<pallas_src>
from functools import partial

import jax
import jax.numpy as jnp
import numpy as np
from jax.experimental import pallas as pl
from jax.experimental.pallas import tpu as pltpu

_CLAMP_MIN = 1e-12
_CLAMP_MAX = 1.0e12


# --------------------------------------------------------------------------
# Kernels
# --------------------------------------------------------------------------
def _distance_body(pooled, mask, centers_t_ref, c_sq_ref, inv_var_ref,
                   partial_ref, *, total_b, block_b):
    """Masked squared distance -> clamp -> per-block partial sum.

    pooled: (TB, C) f32, mask: (TB, K) f32.
    """
    # ||x||^2 + ||c||^2 - 2 x.c   (the x.c term runs on the MXU)
    xc = jnp.dot(pooled, centers_t_ref[...],
                 preferred_element_type=jnp.float32)              # (TB, K)
    x_sq = jnp.sum(pooled * pooled, axis=1, keepdims=True)        # (TB, 1)
    distmat = x_sq + c_sq_ref[...] - 2.0 * xc                     # (TB, K)

    dist = distmat * mask * inv_var_ref[0, 0]                     # multiply by 1/var
    dist = jnp.clip(dist, _CLAMP_MIN, _CLAMP_MAX)

    if total_b % block_b != 0:
        # Zero padded rows of a partial last batch block (after the clip, so
        # garbage/NaN from the padded DMA region cannot leak into the sum).
        row = (pl.program_id(0) * block_b
               + jax.lax.broadcasted_iota(jnp.int32, dist.shape, 0))
        dist = jnp.where(row < total_b, dist, 0.0)

    # Lane-dense (1, 8, 128) partial-sum block; output blocks are disjoint per
    # grid step, so the batch axis is megacore-safe "parallel".
    partial_ref[...] = jnp.full(partial_ref.shape, jnp.sum(dist), jnp.float32)


def _fused_pool_kernel(x_ref, mask_ref, centers_t_ref, c_sq_ref, inv_var_ref,
                       partial_ref, *, total_b, block_b):
    # x_ref: (TB, C, HW) in the input dtype.  Mean over the lane (HW) axis,
    # accumulated in f32 (dtype= keeps the upcast inside the reduction).
    hw = x_ref.shape[-1]
    pooled = jnp.sum(x_ref[...], axis=-1, dtype=jnp.float32) * (1.0 / hw)
    _distance_body(pooled, mask_ref[:, 0, :], centers_t_ref, c_sq_ref,
                   inv_var_ref, partial_ref, total_b=total_b, block_b=block_b)


def _pooled_kernel(pooled_ref, mask_ref, centers_t_ref, c_sq_ref, inv_var_ref,
                   partial_ref, *, total_b, block_b):
    _distance_body(pooled_ref[...].astype(jnp.float32), mask_ref[...],
                   centers_t_ref, c_sq_ref, inv_var_ref, partial_ref,
                   total_b=total_b, block_b=block_b)


# --------------------------------------------------------------------------
# Tiling / VMEM budgeting helpers
# --------------------------------------------------------------------------
def _vmem_capacity_bytes():
    try:
        return int(pltpu.get_tpu_info().vmem_capacity_bytes)
    except Exception:  # pragma: no cover - conservative fallback
        return 64 << 20  # smallest of current generations (v7x: 64 MiB / core)


def _ceil_to(x, m):
    return -(-x // m) * m


def _choose_batch_tile(b, row_vmem_bytes, row_block_bytes, vmem_budget,
                       max_block_bytes=24 << 20):
    """Largest batch tile whose padded, double-buffered footprint fits."""
    rows = vmem_budget // max(1, row_vmem_bytes)
    rows = min(rows, max(1, max_block_bytes // max(1, row_block_bytes)))
    rows = int(max(1, min(rows, b)))
    if b > 1:
        # Keep >= 2 (ideally an even number of) grid steps so the "parallel"
        # batch axis shards across both v7x TensorCores and the input DMA has
        # something to double-buffer against.
        rows = min(rows, -(-b // 2))
        nb = -(-b // rows)
        if nb % 2 and nb < b:
            rows = -(-b // (nb + 1))
    return rows


# --------------------------------------------------------------------------
# Wrapper
# --------------------------------------------------------------------------
def affinity_loss(x_nchw, labels, centers, *, block_rows=None):
    """Forward pass of AffinityLoss.

    x_nchw:  (B, C, H, W) float32/bfloat16
    labels:  (B,)         integer class ids in [0, K)
    centers: (K, C)       float32 parameter
    """
    b, c, h, w = x_nchw.shape
    k, feat = centers.shape
    assert feat == c, "feat_dim must equal the channel count of x"
    hw = h * w

    # ---- centers-only statistics, hoisted out of the per-grid-step body ----
    centers_f32 = centers.astype(jnp.float32)
    centers_t = jnp.transpose(centers_f32)                            # (C, K)
    c_sq = jnp.sum(centers_f32 * centers_f32, axis=1).reshape(1, k)   # (1, K)
    var_sum = jnp.sum(jnp.var(centers_f32, axis=0, ddof=1))           # unbiased, as torch
    inv_var = (1.0 / var_sum).reshape(1, 1).astype(jnp.float32)       # (1, 1) SMEM scalar

    onehot = (labels.astype(jnp.int32)[:, None]
              == jnp.arange(k, dtype=jnp.int32)[None, :]).astype(jnp.float32)

    vmem_cap = _vmem_capacity_bytes()
    vmem_budget = int(vmem_cap * 0.55)

    itemsize = jnp.dtype(x_nchw.dtype).itemsize
    hw_pad = _ceil_to(hw, 128)
    # Fuse the pool only when padding HW up to the 128-lane vreg width wastes
    # little; otherwise pool in XLA (still one lane-dense HBM pass over x).
    use_fused_pool = hw_pad <= int(hw * 1.15)

    if use_fused_pool:
        sublane = max(1, 4 // itemsize) * 8               # 8/16/32 for f32/bf16/i8
        c_pad = _ceil_to(c, sublane)
        row_block_bytes = c_pad * hw_pad * itemsize        # one batch row, padded
        row_temp_bytes = c_pad * hw_pad * 4 if itemsize < 4 else 0
        row_vmem_bytes = 2 * row_block_bytes + row_temp_bytes

        if block_rows is not None:
            tb = int(min(max(1, block_rows), b))
        else:
            tb = _choose_batch_tile(b, row_vmem_bytes, row_block_bytes, vmem_budget)
        nb = pl.cdiv(b, tb)

        resident = _ceil_to(c, 8) * 128 * 4 + 8 * 128 * 4           # centers_t + c_sq
        small = 2 * tb * 8 * 128 * 4 + 2 * 8 * 128 * 4              # mask + out blocks
        vmem_limit = (2 * tb * row_block_bytes + tb * row_temp_bytes
                      + resident + small + (2 << 20))
        vmem_limit = int(min(max(vmem_limit, 16 << 20), int(vmem_cap * 0.9)))

        x_k = x_nchw.reshape(b, c, hw)          # free reshape, no transpose
        mask_k = onehot.reshape(b, 1, k)        # 3-D so TB is unconstrained

        partials = pl.pallas_call(
            partial(_fused_pool_kernel, total_b=b, block_b=tb),
            out_shape=jax.ShapeDtypeStruct((nb, 8, 128), jnp.float32),
            grid=(nb,),
            in_specs=[
                pl.BlockSpec((tb, c, hw), lambda i: (i, 0, 0)),     # x (pipelined)
                pl.BlockSpec((tb, 1, k), lambda i: (i, 0, 0)),      # one-hot mask
                pl.BlockSpec((c, k), lambda i: (0, 0)),             # centers^T (resident)
                pl.BlockSpec((1, k), lambda i: (0, 0)),             # ||c||^2 (resident)
                pl.BlockSpec(memory_space=pltpu.MemorySpace.SMEM),  # 1/var_sum scalar
            ],
            out_specs=pl.BlockSpec((1, 8, 128), lambda i: (i, 0, 0)),
            compiler_params=pltpu.CompilerParams(
                dimension_semantics=("parallel",),
                vmem_limit_bytes=vmem_limit,
            ),
        )(x_k, mask_k, centers_t, c_sq, inv_var)
    else:
        # Global average pool as a plain XLA reduction: one lane-dense HBM
        # pass over x, then the Pallas kernel consumes the tiny (B, C) array.
        pooled = jnp.mean(x_nchw, axis=(2, 3), dtype=jnp.float32)   # (B, C)

        row_bytes = _ceil_to(c, 128) * 4
        if block_rows is not None:
            tb = int(min(max(1, block_rows), b))
            if tb < b and tb % 8:
                tb = min(b, _ceil_to(tb, 8))    # 2-D operand: sublane dim 8-aligned
        else:
            tb = min(b, max(8, ((8 << 20) // row_bytes) // 8 * 8))
        nb = pl.cdiv(b, tb)

        vmem_limit = int(min(max(2 * tb * row_bytes + (4 << 20), 16 << 20),
                             int(vmem_cap * 0.9)))

        partials = pl.pallas_call(
            partial(_pooled_kernel, total_b=b, block_b=tb),
            out_shape=jax.ShapeDtypeStruct((nb, 8, 128), jnp.float32),
            grid=(nb,),
            in_specs=[
                pl.BlockSpec((tb, c), lambda i: (i, 0)),            # pooled (pipelined)
                pl.BlockSpec((tb, k), lambda i: (i, 0)),            # one-hot mask
                pl.BlockSpec((c, k), lambda i: (0, 0)),             # centers^T (resident)
                pl.BlockSpec((1, k), lambda i: (0, 0)),             # ||c||^2 (resident)
                pl.BlockSpec(memory_space=pltpu.MemorySpace.SMEM),  # 1/var_sum scalar
            ],
            out_specs=pl.BlockSpec((1, 8, 128), lambda i: (i, 0, 0)),
            compiler_params=pltpu.CompilerParams(
                dimension_semantics=("parallel",),
                vmem_limit_bytes=vmem_limit,
            ),
        )(pooled, onehot, centers_t, c_sq, inv_var)

    return jnp.sum(partials[:, 0, 0]) / b


# --------------------------------------------------------------------------
# Pure-JAX reference (mirrors the PyTorch forward exactly)
# --------------------------------------------------------------------------
def _reference_loss(x_nchw, labels, centers):
    b = x_nchw.shape[0]
    k = centers.shape[0]
    pooled = jnp.mean(x_nchw, axis=(2, 3), dtype=jnp.float32)          # (B, C)
    distmat = (jnp.sum(pooled**2, axis=1, keepdims=True)
               + jnp.sum(centers**2, axis=1, keepdims=True).T
               - 2.0 * pooled @ centers.T)
    mask = (labels[:, None] == jnp.arange(k)[None, :]).astype(jnp.float32)
    var_sum = jnp.sum(jnp.var(centers, axis=0, ddof=1))
    dist = distmat * mask / var_sum
    return jnp.sum(jnp.clip(dist, _CLAMP_MIN, _CLAMP_MAX)) / b


if __name__ == "__main__":
    NUM_CLASS = 8
    key = jax.random.PRNGKey(0)
    kx1, kx2, kc, kl1, kl2 = jax.random.split(key, 5)

    # --- Test 1: small spatial (8x8=64 < 128 lanes) -> XLA pool + Pallas ---
    B1, C1, H1, W1 = 16, 128, 8, 8
    x1 = jax.random.normal(kx1, (B1, C1, H1, W1), dtype=jnp.float32)
    centers = jax.random.normal(kc, (NUM_CLASS, C1), dtype=jnp.float32)
    labels1 = jax.random.randint(kl1, (B1,), 0, NUM_CLASS, dtype=jnp.int32)
    loss1 = jax.block_until_ready(affinity_loss(x1, labels1, centers, block_rows=8))
    ref1 = jax.block_until_ready(_reference_loss(x1, labels1, centers))
    np.testing.assert_allclose(np.asarray(loss1), np.asarray(ref1),
                               rtol=1e-5, atol=1e-5)

    # --- Test 2: lane-dense spatial (16x16=256) -> fused in-kernel pool,
    #     arbitrary (non-multiple-of-8) batch tile and a padded last block ---
    B2, C2, H2, W2 = 8, 128, 16, 16
    x2 = jax.random.normal(kx2, (B2, C2, H2, W2), dtype=jnp.float32)
    labels2 = jax.random.randint(kl2, (B2,), 0, NUM_CLASS, dtype=jnp.int32)
    loss2 = jax.block_until_ready(affinity_loss(x2, labels2, centers, block_rows=3))
    ref2 = jax.block_until_ready(_reference_loss(x2, labels2, centers))
    np.testing.assert_allclose(np.asarray(loss2), np.asarray(ref2),
                               rtol=1e-5, atol=1e-5)

    print("KERNEL_OK")
</pallas_src>

<mosaic_0001>
module attributes {stable_mosaic.version = 11 : i64} {
  func.func @_pooled_kernel(%arg0: i32, %arg1: memref<8x128xf32, #tpu.memory_space<vmem>>, %arg2: memref<8x8xf32, #tpu.memory_space<vmem>>, %arg3: memref<128x8xf32, #tpu.memory_space<vmem>>, %arg4: memref<1x8xf32, #tpu.memory_space<vmem>>, %arg5: memref<1x1xf32, #tpu.memory_space<smem>>, %arg6: memref<1x8x128xf32, #tpu.memory_space<vmem>>) attributes {dimension_semantics = [#tpu.dimension_semantics<parallel>], iteration_bounds = array<i64: 2>, scalar_prefetch = 0 : i64, scratch_operands = 0 : i64, tpu.core_type = #tpu.core_type<tc>, window_params = [{transform_indices = @transform_0, window_bounds = array<i64: 8, 128>}, {transform_indices = @transform_1, window_bounds = array<i64: 8, 8>}, {pipeline_mode = #tpu.pipeline_mode<synchronous>, transform_indices = @transform_2, window_bounds = array<i64: 128, 8>}, {pipeline_mode = #tpu.pipeline_mode<synchronous>, transform_indices = @transform_3, window_bounds = array<i64: 1, 8>}, {transform_indices = @transform_4, window_bounds = array<i64: 1, 1>}, {transform_indices = @transform_5, window_bounds = array<i64: 1, 8, 128>}]} {
    %c0 = arith.constant 0 : index
    %c0_0 = arith.constant 0 : index
    %0 = vector.load %arg1[%c0, %c0_0] : memref<8x128xf32, #tpu.memory_space<vmem>>, vector<8x128xf32>
    %c0_1 = arith.constant 0 : index
    %c0_2 = arith.constant 0 : index
    %1 = vector.load %arg2[%c0_1, %c0_2] : memref<8x8xf32, #tpu.memory_space<vmem>>, vector<8x8xf32>
    %c0_3 = arith.constant 0 : index
    %c0_4 = arith.constant 0 : index
    %2 = vector.load %arg3[%c0_3, %c0_4] : memref<128x8xf32, #tpu.memory_space<vmem>>, vector<128x8xf32>
    %cst = arith.constant dense<0.000000e+00> : vector<8x8xf32>
    %3 = tpu.matmul %0, %2, %cst {dimension_numbers = #tpu.dot_dimension_numbers<[1], [0], [0], [1], [0, 0, 1, 1], [], []>} : vector<8x128xf32>, vector<128x8xf32>, vector<8x8xf32> -> vector<8x8xf32>
    %4 = arith.mulf %0, %0 : vector<8x128xf32>
    %cst_5 = arith.constant dense<0.000000e+00> : vector<8xf32>
    %5 = vector.multi_reduction <add>, %4, %cst_5 [1] : vector<8x128xf32> to vector<8xf32>
    %6 = vector.shape_cast %5 : vector<8xf32> to vector<8x1xf32>
    %c0_6 = arith.constant 0 : index
    %c0_7 = arith.constant 0 : index
    %7 = vector.load %arg4[%c0_6, %c0_7] : memref<1x8xf32, #tpu.memory_space<vmem>>, vector<1x8xf32>
    %8 = vector.broadcast %6 : vector<8x1xf32> to vector<8x8xf32>
    %9 = vector.broadcast %7 : vector<1x8xf32> to vector<8x8xf32>
    %10 = arith.addf %8, %9 : vector<8x8xf32>
    %cst_8 = arith.constant 2.000000e+00 : f32
    %11 = vector.broadcast %cst_8 : f32 to vector<8x8xf32>
    %12 = arith.mulf %11, %3 : vector<8x8xf32>
    %13 = arith.subf %10, %12 : vector<8x8xf32>
    %14 = arith.mulf %13, %1 : vector<8x8xf32>
    %c0_9 = arith.constant 0 : index
    %c0_10 = arith.constant 0 : index
    %15 = memref.load %arg5[%c0_9, %c0_10] : memref<1x1xf32, #tpu.memory_space<smem>>
    %16 = vector.broadcast %15 : f32 to vector<8x8xf32>
    %17 = arith.mulf %14, %16 : vector<8x8xf32>
    %cst_11 = arith.constant 9.99999996E-13 : f32
    %cst_12 = arith.constant 9.99999995E+11 : f32
    %18 = vector.broadcast %cst_11 : f32 to vector<8x8xf32>
    %19 = arith.maximumf %18, %17 : vector<8x8xf32>
    %20 = vector.broadcast %cst_12 : f32 to vector<8x8xf32>
    %21 = arith.minimumf %20, %19 : vector<8x8xf32>
    %22 = vector.shape_cast %21 : vector<8x8xf32> to vector<1x8x8xf32>
    %cst_13 = arith.constant dense<0.000000e+00> : vector<1xf32>
    %23 = vector.multi_reduction <add>, %22, %cst_13 [1, 2] : vector<1x8x8xf32> to vector<1xf32>
    %24 = vector.shape_cast %23 : vector<1xf32> to vector<1x1x1xf32>
    %25 = vector.extract %24[0, 0, 0] : f32 from vector<1x1x1xf32>
    %26 = vector.broadcast %25 : f32 to vector<1x8x128xf32>
    %c0_14 = arith.constant 0 : index
    %c0_15 = arith.constant 0 : index
    %c0_16 = arith.constant 0 : index
    %27 = vector.load %arg6[%c0_14, %c0_15, %c0_16] : memref<1x8x128xf32, #tpu.memory_space<vmem>>, vector<1x8x128xf32>
    tpu.vector_store %arg6[%c0_14, %c0_15, %c0_16], %26 {strides = array<i32>} : memref<1x8x128xf32, #tpu.memory_space<vmem>>, vector<1x8x128xf32>,
    return
  }
  func.func @transform_0(%arg0: i32) -> (i32, i32) {
    %c0_i32 = arith.constant 0 : i32
    %c0_i32_0 = arith.constant 0 : i32
    return %arg0, %c0_i32 : i32, i32
  }
  func.func @transform_1(%arg0: i32) -> (i32, i32) {
    %c0_i32 = arith.constant 0 : i32
    %c0_i32_0 = arith.constant 0 : i32
    return %arg0, %c0_i32 : i32, i32
  }
  func.func @transform_2(%arg0: i32) -> (i32, i32) {
    %c0_i32 = arith.constant 0 : i32
    %c0_i32_0 = arith.constant 0 : i32
    %c0_i32_1 = arith.constant 0 : i32
    return %c0_i32, %c0_i32_0 : i32, i32
  }
  func.func @transform_3(%arg0: i32) -> (i32, i32) {
    %c0_i32 = arith.constant 0 : i32
    %c0_i32_0 = arith.constant 0 : i32
    %c0_i32_1 = arith.constant 0 : i32
    return %c0_i32, %c0_i32_0 : i32, i32
  }
  func.func @transform_4(%arg0: i32) -> (i32, i32) {
    %c0_i32 = arith.constant 0 : i32
    %c0_i32_0 = arith.constant 0 : i32
    %c0_i32_1 = arith.constant 0 : i32
    return %c0_i32, %c0_i32_0 : i32, i32
  }
  func.func @transform_5(%arg0: i32) -> (i32, i32, i32) {
    %c0_i32 = arith.constant 0 : i32
    %c0_i32_0 = arith.constant 0 : i32
    %c0_i32_1 = arith.constant 0 : i32
    return %arg0, %c0_i32, %c0_i32_0 : i32, i32, i32
  }
}

</mosaic_0001>

<llo_original>
// kernel: tpu_custom_call.1
$region0: #{tpu_custom_call.1}
  #allocation0 [shape = 'u32[]', space=smem, size = 0x4, offset = 0x4, fixed_abs, tag = 'smem constant byte address 0x4 - core index']
  #allocation1 [shape = 'u32[144,128]{1,0:T(1,128)}', space=vmem, size = 0x12000, scoped, tag = 'internal scratch']
  #allocation2 [shape = 'f32[1,1]{1,0:T(1,128)S(6)}', space=smem, size = 0x200, scoped, tag = 'scoped memory for tpu_custom_call.1']
  %s0 = inlined_call_operand.vmem [shape: f32[16,128], index: 0, kind: input, shape index: {}]
  %s1 = inlined_call_operand.vmem [shape: f32[16,8], index: 1, kind: input, shape index: {}]
  %s2 = inlined_call_operand.vmem [shape: f32[128,8], index: 2, kind: input, shape index: {}]
  %s3 = inlined_call_operand.vmem [shape: f32[1,8], index: 3, kind: input, shape index: {}]
  %s4 = inlined_call_operand.<no memory space> [shape: f32[1,1], index: 4, kind: input, shape index: {}]
  %s5 = inlined_call_operand.hbm [shape: f32[2,8,128], index: 5, kind: output, shape index: {}]
  %s6 = sld [smem:[#allocation0]]
  $region53: #{tpu_custom_call.1} parent=0
    _
  %s8 = ssub.s32 1, %s6
  %s9 = scalar_select 0, %s8, %s6
  %10 = sst [smem:[#allocation2]] %s4
  $region1: #{tpu_custom_call.1} parent=0
    #allocation3 [shape = 'u8[8192]{0}', space=vmem, size = 0x2000, scoped, tag = 'output window, operand 0']
    #allocation4 [shape = 's32[2]{0}', space=sflag, size = 0x8, scoped, tag = 'scoped memory for tpu_custom_call.1']
    %11 = vsyncpa [#allocation4], 0
    %s12 = scalar_lea.sflag [#allocation4], 1
    %13 = vsyncpa %s12, 0
    loop: start=0, step=1, limit=4
    $region2: #{tpu_custom_call.1} parent=1 // loop_pre_header
      _
    $region3: #{tpu_custom_call.1} parent=1 // loop_header
      %s15 = sphi 0, %s19
      %p16 = scmp.ge.s32.totalorder %s15, 4
      %s25 = sphi 0, %s27
      %s28 = sphi 0, %s25
      %s29 = sphi 0, %s28
      %s45 = sphi 0, %s29
      %s51 = sphi 0, %s53
      %s54 = sphi 0, %s51
      %s55 = sphi 0, %s54
      %s71 = sphi 0, %s55
      %s75 = sphi 0, %s75
      %s77 = sphi 0, %s75
      %s78 = sphi 0, %s77
      %s92 = sphi 0, %s78
      %s96 = sphi 0, %s96
      %s98 = sphi 0, %s96
      %s99 = sphi 0, %s98
      %s113 = sphi 0, %s99
      %s117 = sphi 0, %s117
      %s119 = sphi 0, %s117
      %s120 = sphi 0, %s119
      %s134 = sphi 0, %s120
      %s140 = sphi 0, %s142
      %s143 = sphi 0, %s140
      %s144 = sphi 0, %s143
      %s160 = sphi 0, %s144
    $region4: #{tpu_custom_call.1} parent=1 // loop_header_branch
      %18 = sbr.rel (%p16) target = $region8
    $region5: #{tpu_custom_call.1} parent=1 // loop_body
      %s20 = ssub.s32 %s15, 1
      %s21 = ssub.s32 %s15, 2
      %s22 = sadd.s32 %s15, 1
      %s23 = ssub.s32 %s15, %s22
      %p24 = scmp.eq.s32.totalorder %s23, 0
      %s26 = sadd.s32 %s25, 1
      %s27 = scalar_select %p24, %s25, %s26
      %p30 = pneg %p24
      %p31 = scmp.eq.s32.totalorder %s15, 1
      %p32 = por %p30, %p31
      %p33 = scmp.ne.s32.totalorder %s25, %s28
      %p34 = scmp.eq.s32.totalorder %s15, 0
      %p35 = por %p33, %p34
      %p36 = scmp.ne.s32.totalorder %s25, %s28
      %p37 = scmp.eq.s32.totalorder %s20, 1
      %p38 = por %p36, %p37
      %p39 = scmp.ne.s32.totalorder %s28, %s29
      %p40 = scmp.eq.s32.totalorder %s20, 0
      %p41 = por %p39, %p40
      %p42 = scmp.ne.s32.totalorder %s28, %s29
      %p43 = scmp.eq.s32.totalorder %s21, 1
      %p44 = por %p42, %p43
      %p46 = scmp.ne.s32.totalorder %s29, %s45
      %p47 = scmp.eq.s32.totalorder %s21, 0
      %p48 = por %p46, %p47
      %s49 = ssub.s32 %s15, %s22
      %p50 = scmp.eq.s32.totalorder %s49, 0
      %s52 = sadd.s32 %s51, 1
      %s53 = scalar_select %p50, %s51, %s52
      %p56 = pneg %p50
      %p57 = scmp.eq.s32.totalorder %s15, 1
      %p58 = por %p56, %p57
      %p59 = scmp.ne.s32.totalorder %s51, %s54
      %p60 = scmp.eq.s32.totalorder %s15, 0
      %p61 = por %p59, %p60
      %p62 = scmp.ne.s32.totalorder %s51, %s54
      %p63 = scmp.eq.s32.totalorder %s20, 1
      %p64 = por %p62, %p63
      %p65 = scmp.ne.s32.totalorder %s54, %s55
      %p66 = scmp.eq.s32.totalorder %s20, 0
      %p67 = por %p65, %p66
      %p68 = scmp.ne.s32.totalorder %s54, %s55
      %p69 = scmp.eq.s32.totalorder %s21, 1
      %p70 = por %p68, %p69
      %p72 = scmp.ne.s32.totalorder %s55, %s71
      %p73 = scmp.eq.s32.totalorder %s21, 0
      %p74 = por %p72, %p73
      %s76 = sadd.s32 %s75, 1
      %p79 = scmp.eq.s32.totalorder %s15, 1
      %p80 = scmp.ne.s32.totalorder %s75, %s77
      %p81 = scmp.eq.s32.totalorder %s15, 0
      %p82 = por %p80, %p81
      %p83 = scmp.ne.s32.totalorder %s75, %s77
      %p84 = scmp.eq.s32.totalorder %s20, 1
      %p85 = por %p83, %p84
      %p86 = scmp.ne.s32.totalorder %s77, %s78
      %p87 = scmp.eq.s32.totalorder %s20, 0
      %p88 = por %p86, %p87
      %p89 = scmp.ne.s32.totalorder %s77, %s78
      %p90 = scmp.eq.s32.totalorder %s21, 1
      %p91 = por %p89, %p90
      %p93 = scmp.ne.s32.totalorder %s78, %s92
      %p94 = scmp.eq.s32.totalorder %s21, 0
      %p95 = por %p93, %p94
      %s97 = sadd.s32 %s96, 1
      %p100 = scmp.eq.s32.totalorder %s15, 1
      %p101 = scmp.ne.s32.totalorder %s96, %s98
      %p102 = scmp.eq.s32.totalorder %s15, 0
      %p103 = por %p101, %p102
      %p104 = scmp.ne.s32.totalorder %s96, %s98
      %p105 = scmp.eq.s32.totalorder %s20, 1
      %p106 = por %p104, %p105
      %p107 = scmp.ne.s32.totalorder %s98, %s99
      %p108 = scmp.eq.s32.totalorder %s20, 0
      %p109 = por %p107, %p108
      %p110 = scmp.ne.s32.totalorder %s98, %s99
      %p111 = scmp.eq.s32.totalorder %s21, 1
      %p112 = por %p110, %p111
      %p114 = scmp.ne.s32.totalorder %s99, %s113
      %p115 = scmp.eq.s32.totalorder %s21, 0
      %p116 = por %p114, %p115
      %s118 = sadd.s32 %s117, 1
      %p121 = scmp.eq.s32.totalorder %s15, 1
      %p122 = scmp.ne.s32.totalorder %s117, %s119
      %p123 = scmp.eq.s32.totalorder %s15, 0
      %p124 = por %p122, %p123
      %p125 = scmp.ne.s32.totalorder %s117, %s119
      %p126 = scmp.eq.s32.totalorder %s20, 1
      %p127 = por %p125, %p126
      %p128 = scmp.ne.s32.totalorder %s119, %s120
      %p129 = scmp.eq.s32.totalorder %s20, 0
      %p130 = por %p128, %p129
      %p131 = scmp.ne.s32.totalorder %s119, %s120
      %p132 = scmp.eq.s32.totalorder %s21, 1
      %p133 = por %p131, %p132
      %p135 = scmp.ne.s32.totalorder %s120, %s134
      %p136 = scmp.eq.s32.totalorder %s21, 0
      %p137 = por %p135, %p136
      %s138 = ssub.s32 %s15, %s22
      %p139 = scmp.eq.s32.totalorder %s138, 0
      %s141 = sadd.s32 %s140, 1
      %s142 = scalar_select %p139, %s140, %s141
      %p145 = pneg %p139
      %p146 = scmp.eq.s32.totalorder %s15, 1
      %p147 = por %p145, %p146
      %p148 = scmp.ne.s32.totalorder %s140, %s143
      %p149 = scmp.eq.s32.totalorder %s15, 0
      %p150 = por %p148, %p149
      %p151 = scmp.ne.s32.totalorder %s140, %s143
      %p152 = scmp.eq.s32.totalorder %s20, 1
      %p153 = por %p151, %p152
      %p154 = scmp.ne.s32.totalorder %s143, %s144
      %p155 = scmp.eq.s32.totalorder %s20, 0
      %p156 = por %p154, %p155
      %p157 = scmp.ne.s32.totalorder %s143, %s144
      %p158 = scmp.eq.s32.totalorder %s21, 1
      %p159 = por %p157, %p158
      %p161 = scmp.ne.s32.totalorder %s144, %s160
      %p162 = scmp.eq.s32.totalorder %s21, 0
      %p163 = por %p161, %p162
      %p164 = scmp.le.s32.totalorder 1, %s15
      %p165 = scmp.lt.s32.totalorder %s15, 3
      %p166 = pnand %p164, %p165
      %p167 = pneg %p166
      // Predicated region
      $region9: #{tpu_custom_call.1} parent=5 // pred_check
        _
      $region10: #{tpu_custom_call.1} parent=5 // pred_check_branch
        %169 = sbr.rel (%p166) target = $region12
      $region11: #{tpu_custom_call.1} parent=5 // pred_region
        %s170 = ssub.s32 %s15, 1
        // Predicated region
        $region13: #{tpu_custom_call.1} parent=11 // pred_check
          %p171 = pneg %p88
        $region14: #{tpu_custom_call.1} parent=11 // pred_check_branch
          %173 = sbr.rel (%p171) target = $region16
        $region15: #{tpu_custom_call.1} parent=11 // pred_region
          _
        $region16: #{tpu_custom_call.1} parent=11 // pred_fallthru
          _
        // Predicated region
        $region17: #{tpu_custom_call.1} parent=11 // pred_check
          %p174 = pneg %p109
        $region18: #{tpu_custom_call.1} parent=11 // pred_check_branch
          %176 = sbr.rel (%p174) target = $region20
        $region19: #{tpu_custom_call.1} parent=11 // pred_region
          _
        $region20: #{tpu_custom_call.1} parent=11 // pred_fallthru
          _
        // Predicated region
        $region21: #{tpu_custom_call.1} parent=11 // pred_check
          %p177 = pneg %p130
        $region22: #{tpu_custom_call.1} parent=11 // pred_check_branch
          %179 = sbr.rel (%p177) target = $region24
        $region23: #{tpu_custom_call.1} parent=11 // pred_region
          _
        $region24: #{tpu_custom_call.1} parent=11 // pred_fallthru
          _
      $region12: #{tpu_custom_call.1} parent=5 // pred_fallthru
        _
      %p180 = scmp.lt.s32.totalorder %s15, 2
      // Predicated region
      $region25: #{tpu_custom_call.1} parent=5 // pred_check
        %p181 = pneg %p180
      $region26: #{tpu_custom_call.1} parent=5 // pred_check_branch
        %183 = sbr.rel (%p181) target = $region28
      $region27: #{tpu_custom_call.1} parent=5 // pred_region
        // Predicated region
        $region29: #{tpu_custom_call.1} parent=27 // pred_check
          %p184 = pneg %p35
        $region30: #{tpu_custom_call.1} parent=27 // pred_check_branch
          %186 = sbr.rel (%p184) target = $region32
        $region31: #{tpu_custom_call.1} parent=27 // pred_region
          %p187 = scmp.lt.s32.totalorder %s15, 1
          %s188 = scalar_select %p187, %s15, 1
          %s189 = smul.addr %s188, 8
          %s190 = scalar_lea.vmem %s0, %s189
        $region32: #{tpu_custom_call.1} parent=27 // pred_fallthru
          _
        // Predicated region
        $region33: #{tpu_custom_call.1} parent=27 // pred_check
          %p191 = pneg %p61
        $region34: #{tpu_custom_call.1} parent=27 // pred_check_branch
          %193 = sbr.rel (%p191) target = $region36
        $region35: #{tpu_custom_call.1} parent=27 // pred_region
          %p194 = scmp.lt.s32.totalorder %s15, 1
          %s195 = scalar_select %p194, %s15, 1
          %s196 = smul.addr %s195, 8
          %s197 = scalar_lea.vmem %s1, %s196
        $region36: #{tpu_custom_call.1} parent=27 // pred_fallthru
          _
      $region28: #{tpu_custom_call.1} parent=5 // pred_fallthru
        _
      %p198 = scmp.le.s32.totalorder 1, %s15
      %p199 = scmp.lt.s32.totalorder %s15, 3
      %p200 = pnand %p198, %p199
      %p201 = pneg %p200
      // Predicated region
      $region37: #{tpu_custom_call.1} parent=5 // pred_check
        _
      $region38: #{tpu_custom_call.1} parent=5 // pred_check_branch
        %203 = sbr.rel (%p200) target = $region40
      $region39: #{tpu_custom_call.1} parent=5 // pred_region
        %s204 = ssub.s32 %s15, 1
        %p205 = scmp.lt.s32.totalorder %s20, 1
        %s206 = scalar_select %p205, %s20, 1
        %s207 = smul.addr %s206, 8
        %s208 = scalar_lea.vmem %s0, %s207
        %p209 = pneg %p41
        %p210 = pneg %p38
        %p211 = scmp.lt.s32.totalorder %s20, 1
        %s212 = scalar_select %p211, %s20, 1
        %s213 = smul.addr %s212, 8
        %s214 = scalar_lea.vmem %s1, %s213
        %p215 = pneg %p67
        %p216 = pneg %p64
        %p217 = pneg %p88
        %p218 = pneg %p85
        %p219 = pneg %p109
        %p220 = pneg %p106
        %p221 = pneg %p130
        %p222 = pneg %p127
        %p223 = pneg %p156
        %p224 = pneg %p153
        %s225 = sand.u32 %s143, 1
        %s226 = scalar_lea.sflag [#allocation4], %s225
        %s227 = sand.u32 %s143, 1
        %s228 = smul.addr %s227, 8
        %s229 = scalar_lea.vmem [#allocation3], %s228
        %p230 = scmp.lt.s32.totalorder %s20, 1
        %s231 = scalar_select %p230, %s20, 1
        %s232 = smul.addr %s231, 8
        %s233 = scalar_lea.vmem %s0, %s232
        %p234 = scmp.lt.s32.totalorder %s20, 1
        %s235 = scalar_select %p234, %s20, 1
        %s236 = smul.addr %s235, 8
        %s237 = scalar_lea.vmem %s1, %s236
        %v238 = vld [vmem:[%s233] sm:$0xff]
        %v239 = vld [vmem:[%s237] sm:$0xff]
        %v240 = vld [vmem:[%s2] sm:$0xff]
        %v241 = vld [vmem:[%s2 + $0x8] sm:$0xff]
        %v242 = vld [vmem:[%s2 + $0x10] sm:$0xff]
        %v243 = vld [vmem:[%s2 + $0x18] sm:$0xff]
        %v244 = vld [vmem:[%s2 + $0x20] sm:$0xff]
        %v245 = vld [vmem:[%s2 + $0x28] sm:$0xff]
        %v246 = vld [vmem:[%s2 + $0x30] sm:$0xff]
        %v247 = vld [vmem:[%s2 + $0x38] sm:$0xff]
        %v248 = vld [vmem:[%s2 + $0x40] sm:$0xff]
        %v249 = vld [vmem:[%s2 + $0x48] sm:$0xff]
        %v250 = vld [vmem:[%s2 + $0x50] sm:$0xff]
        %v251 = vld [vmem:[%s2 + $0x58] sm:$0xff]
        %v252 = vld [vmem:[%s2 + $0x60] sm:$0xff]
        %v253 = vld [vmem:[%s2 + $0x68] sm:$0xff]
        %v254 = vld [vmem:[%s2 + $0x70] sm:$0xff]
        %v255 = vld [vmem:[%s2 + $0x78] sm:$0xff]
        %256 = vmatprep.subr.mxu0 0.0
        %257 = vmatpush1.msra.mxu0 %v240
        %258 = vmatprep.subr.mxu0 0.0
        %259 = vmatpush1.msra.mxu0 %v241
        %260 = vmatprep.subr.mxu0 0.0
        %261 = vmatpush1.msra.mxu0 %v242
        %262 = vmatprep.subr.mxu0 0.0
        %263 = vmatpush1.msra.mxu0 %v243
        %264 = vmatprep.subr.mxu0 0.0
        %265 = vmatpush1.msra.mxu0 %v244
        %266 = vmatprep.subr.mxu0 0.0
        %267 = vmatpush1.msra.mxu0 %v245
        %268 = vmatprep.subr.mxu0 0.0
        %269 = vmatpush1.msra.mxu0 %v246
        %270 = vmatprep.subr.mxu0 0.0
        %271 = vmatpush1.msra.mxu0 %v247
        %272 = vmatprep.subr.mxu0 0.0
        %273 = vmatpush1.msra.mxu0 %v248
        %274 = vmatprep.subr.mxu0 0.0
        %275 = vmatpush1.msra.mxu0 %v249
        %276 = vmatprep.subr.mxu0 0.0
        %277 = vmatpush1.msra.mxu0 %v250
        %278 = vmatprep.subr.mxu0 0.0
        %279 = vmatpush1.msra.mxu0 %v251
        %280 = vmatprep.subr.mxu0 0.0
        %281 = vmatpush1.msra.mxu0 %v252
        %282 = vmatprep.subr.mxu0 0.0
        %283 = vmatpush1.msra.mxu0 %v253
        %284 = vmatprep.subr.mxu0 0.0
        %285 = vmatpush1.msra.mxu0 %v254
        %286 = vmatprep.subr.mxu0 0.0
        %287 = vmatpush1.msra.mxu0 %v255
        %288 = vmatprep.subr.mxu0 0.0
        %289 = vmatpush1.msra.mxu0 0.0
        %290 = vmatprep.subr.mxu0 0.0
        %291 = vmatpush1.msra.mxu0 0.0
        %292 = vmatprep.subr.mxu0 0.0
        %293 = vmatpush1.msra.mxu0 0.0
        %294 = vmatprep.subr.mxu0 0.0
        %295 = vmatpush1.msra.mxu0 0.0
        %296 = vmatprep.subr.mxu0 0.0
        %297 = vmatpush1.msra.mxu0 0.0
        %298 = vmatprep.subr.mxu0 0.0
        %299 = vmatpush1.msra.mxu0 0.0
        %300 = vmatprep.subr.mxu0 0.0
        %301 = vmatpush1.msra.mxu0 0.0
        %302 = vmatprep.subr.mxu0 0.0
        %303 = vmatpush1.msra.mxu0 0.0
        %304 = vmatprep.subr.mxu0 0.0
        %305 = vmatpush1.msra.mxu0 0.0
        %306 = vmatprep.subr.mxu0 0.0
        %307 = vmatpush1.msra.mxu0 0.0
        %308 = vmatprep.subr.mxu0 0.0
        %309 = vmatpush1.msra.mxu0 0.0
        %310 = vmatprep.subr.mxu0 0.0
        %311 = vmatpush1.msra.mxu0 0.0
        %312 = vmatprep.subr.mxu0 0.0
        %313 = vmatpush1.msra.mxu0 0.0
        %314 = vmatprep.subr.mxu0 0.0
        %315 = vmatpush1.msra.mxu0 0.0
        %316 = vmatprep.subr.mxu0 0.0
        %317 = vmatpush1.msra.mxu0 0.0
        %318 = vmatprep.subr.mxu0 0.0
        %319 = vmatpush1.msra.mxu0 0.0
        %320 = vmatprep.mubr.f32.mxu0 0.0
        %321 = vmatmul.mubr.f32.gmra.mrb[0].mxu0 %v238
        %v322 = vpop.f32.mrb[0].mxu0
        %v323 = vadd.f32 0.0, %v322
        %v324 = vpop.f32.mrb[0].mxu0
        %325 = vdwg.mxu0
        %v326 = vmul.f32 %v238, %v238
        %327 = vadd.xlane.f32.xlu0 %v326
        %v328 = vpop.xlane.xlu0 %327
        %v329 = vld [vmem:[%s3] sm:$0x1]
        %v331 = vlaneseq
        %v332 = vshrl.u32 %v331, 7
        %v333 = vsub.s32 0, %v332
        %v334 = vrot.slane %v329, %v333
        %v336 = vadd.f32 %v328, %v334
        %v337 = vmul.f32 %v323, 2.0
        %v338 = vsub.f32 %v336, %v337
        %v339 = vmul.f32 %v338, %v239
        %s340 = sld [smem:[#allocation2]]
        %v341 = vstv %s340
        %v342 = vmul.f32 %v339, %v341
        %v343 = vmax.f32 %v342, 1e-12
        %v344 = vmin.f32 %v343, 1e+12
        %vm345 = vcmask 64512
        %v346 = vsel %vm345, %v344, 0.0
        %347 = vadd.xlane.f32.xlu0 %v346
        %v348 = vpop.xlane.xlu0 %347
        %v349 = vrot.slane %v348, 4
        %v350 = vadd.f32 %v348, %v349
        %v351 = vrot.slane %v350, 2
        %v352 = vadd.f32 %v350, %v351
        %v353 = vrot.slane %v352, 1
        %v354 = vadd.f32 %v352, %v353
        %s355 = vtos %v354
        %v356 = vstv %s355
        %357 = vst [vmem:[%s229] sm:$0xff] %v356
        %s358 = sand.u32 %s143, 1
        %s359 = scalar_lea.sflag [#allocation4], %s358
        %s360 = sand.u32 %s143, 1
        %s361 = smul.addr %s360, 8
        %s362 = scalar_lea.vmem [#allocation3], %s361
        // Predicated region
        $region41: #{tpu_custom_call.1} parent=39 // pred_check
          %p363 = pneg %p153
        $region42: #{tpu_custom_call.1} parent=39 // pred_check_branch
          %365 = sbr.rel (%p363) target = $region44
        $region43: #{tpu_custom_call.1} parent=39 // pred_region
          %s367 = ssub.s32 128, 128
          %368 = vsyncadd %s359, %s367
          %s369 = smul.addr %s20, 128
          %s370 = scalar_lea.hbm %s5, %s369
          %s372 = sshll.u32 %s362, 4
          %s373 = int_to_ptr.vmem [resolvable:$true] %s372
          %375 = dma.vmem_to_hbm [thread:$0]  %s373, 128, %s370, %s359
        $region44: #{tpu_custom_call.1} parent=39 // pred_fallthru
          _
      $region40: #{tpu_custom_call.1} parent=5 // pred_fallthru
        _
      %p376 = scmp.le.s32.totalorder 2, %s15
      // Predicated region
      $region45: #{tpu_custom_call.1} parent=5 // pred_check
        %p377 = pneg %p376
      $region46: #{tpu_custom_call.1} parent=5 // pred_check_branch
        %379 = sbr.rel (%p377) target = $region48
      $region47: #{tpu_custom_call.1} parent=5 // pred_region
        %s380 = ssub.s32 %s15, 2
        // Predicated region
        $region49: #{tpu_custom_call.1} parent=47 // pred_check
          %p381 = pneg %p159
        $region50: #{tpu_custom_call.1} parent=47 // pred_check_branch
          %383 = sbr.rel (%p381) target = $region52
        $region51: #{tpu_custom_call.1} parent=47 // pred_region
          %s384 = sand.u32 %s144, 1
          %s385 = scalar_lea.sflag [#allocation4], %s384
          %s386 = sand.u32 %s144, 1
          %s387 = smul.addr %s386, 8
          %s388 = scalar_lea.vmem [#allocation3], %s387
          %389 = dma.done %s385, 128
        $region52: #{tpu_custom_call.1} parent=47 // pred_fallthru
          _
      $region48: #{tpu_custom_call.1} parent=5 // pred_fallthru
        _
    $region6: #{tpu_custom_call.1} parent=1 // loop_footer
      %s19 = sadd.s32 1, %s15
    $region7: #{tpu_custom_call.1} parent=1 // loop_footer_branch
      %14 = sbr.rel target = $region3
    $region8: #{tpu_custom_call.1} parent=1 // loop_exit
      _
    %390 = vsyncpa [#allocation4], 1
    %s391 = scalar_lea.sflag [#allocation4], 1
    %392 = vsyncpa %s391, 1

</llo_original>
